<compile_context>
chip_gen: v7x
topology: tpu7x:2x2x1
jax: 0.10.0
libtpu: 0.0.40
codegen_flags: <defaults>
</compile_context>

<pallas_src>
import functools

import jax
import jax.numpy as jnp
from jax import lax
from jax.experimental import pallas as pl
from jax.experimental.pallas import tpu as pltpu


def _masked_layernorm_kernel(x_ref, mask_ref, gamma_ref, beta_ref, o_ref, *,
                             eps, tm):
    i = pl.program_id(0)
    x = x_ref[...].astype(jnp.float32)                     # (TM, F) f32 compute
    mean = jnp.mean(x, axis=-1, keepdims=True)             # (TM, 1)
    xc = x - mean
    var = jnp.mean(xc * xc, axis=-1, keepdims=True)        # centered two-pass var
    inv = lax.rsqrt(var + eps)                             # EUP slot (free-ish)
    y = xc * inv * gamma_ref[...] + beta_ref[...]          # (TM, F)

    # Mask is resident for the whole call; slice this tile's rows out of it.
    start = i * tm
    if tm % 8 == 0:
        start = pl.multiple_of(start, 8)
    keep = mask_ref[pl.ds(start, tm), :] != 0.0            # (TM, 1)
    # where (not multiply) => masked-out rows are exact zeros regardless of x.
    o_ref[...] = jnp.where(keep, y, 0.0).astype(o_ref.dtype)


def _round_up(v, m):
    return ((v + m - 1) // m) * m


@functools.partial(jax.jit, static_argnames=("eps", "block_rows"))
def masked_layer_norm_1d(x, mask, gamma, beta, *, eps=1e-5, block_rows=512):
    """y = scatter(LayerNorm(x[mask > 0])) as one fused Pallas kernel.

    x:     (N, F) float (f32 or bf16; compute is upcast to f32 in-kernel)
    mask:  (N,)   any numeric dtype; rows with mask <= 0 are zeroed
    gamma: (F,)   LayerNorm weight
    beta:  (F,)   LayerNorm bias
    """
    n, f = x.shape
    itemsize = jnp.dtype(x.dtype).itemsize
    row_align = 16 if itemsize == 2 else 8      # (16,128) tile rule for 2-byte dtypes

    # --- choose the row tile (block_rows is the main tuning knob) ------------
    tm = min(block_rows, n)
    if tm < n:
        tm = max(row_align, (tm // row_align) * row_align)

    # Cap so double-buffered x + out tiles plus f32 temps stay ~<= 24 MiB:
    # safe on v7x's 64 MiB VMEM, trivially fine on v5e/v6e's 128 MiB.
    vmem_budget = 24 * (1 << 20)
    bytes_per_row = f * (4 * itemsize + 8)      # 2-buf x + 2-buf out + f32 temps
    tm_cap = max(row_align, (vmem_budget // bytes_per_row) // row_align * row_align)
    tm = min(tm, tm_cap)

    # Keep >= 2 grid steps when there is more than one tile's worth of rows so
    # v7x's second TensorCore gets work via dimension_semantics=("parallel",).
    if n > row_align and pl.cdiv(n, tm) < 2:
        tm = min(tm, _round_up(pl.cdiv(n, 2), row_align))

    grid0 = pl.cdiv(n, tm)
    n_pad = grid0 * tm

    # Semantics-preserving mask: compare > 0 in the ORIGINAL dtype (fractional
    # float masks keep the row, matching PyTorch), then ship 0.0/1.0 f32.
    mask2d = (mask > 0).astype(jnp.float32).reshape(n, 1)
    if n_pad != n:
        mask2d = jnp.pad(mask2d, ((0, n_pad - n), (0, 0)))   # padded rows -> 0 (ignored)

    g2d = gamma.reshape(1, f).astype(jnp.float32)
    b2d = beta.reshape(1, f).astype(jnp.float32)

    # Explicit VMEM budget instead of the scoped default (16/32 MiB depending
    # on generation); generous headroom but well under v7x's 64 MiB physical.
    pipeline_bytes = 2 * 2 * tm * f * itemsize            # double-buffered x + out
    resident_bytes = n_pad * 4 + 2 * f * 4                # mask + gamma + beta
    temps_bytes = 2 * tm * f * 4                          # f32 intermediates headroom
    needed = pipeline_bytes + resident_bytes + temps_bytes + (2 << 20)
    vmem_limit = int(min(48 * (1 << 20), max(16 * (1 << 20), 2 * needed)))

    cost = pl.CostEstimate(
        flops=7 * n * f,                                   # sub/sq/mul/affine
        transcendentals=n,                                 # one rsqrt per row
        bytes_accessed=2 * n * f * itemsize                # x in + y out
        + n_pad * 4 + 2 * f * 4,                           # mask + gamma + beta
    )

    kernel = functools.partial(_masked_layernorm_kernel, eps=eps, tm=tm)
    return pl.pallas_call(
        kernel,
        out_shape=jax.ShapeDtypeStruct((n, f), x.dtype),
        grid_spec=pltpu.PrefetchScalarGridSpec(
            num_scalar_prefetch=0,
            grid=(grid0,),
            in_specs=[
                pl.BlockSpec((tm, f), lambda i: (i, 0)),       # x rows (pipelined)
                pl.BlockSpec((n_pad, 1), lambda i: (0, 0)),    # full mask, resident
                pl.BlockSpec((1, f), lambda i: (0, 0)),        # gamma (resident)
                pl.BlockSpec((1, f), lambda i: (0, 0)),        # beta  (resident)
            ],
            out_specs=pl.BlockSpec((tm, f), lambda i: (i, 0)),
        ),
        compiler_params=pltpu.CompilerParams(
            dimension_semantics=("parallel",),                 # rows independent
            vmem_limit_bytes=vmem_limit,
        ),
        cost_estimate=cost,
    )(x, mask2d, g2d, b2d)


if __name__ == "__main__":
    key = jax.random.PRNGKey(0)
    k_x, k_g, k_b = jax.random.split(key, 3)

    batch, feature_n = 16, 128   # feature dim lane-dense (multiple of 128)
    x = jax.random.normal(k_x, (batch, feature_n), jnp.float32)
    # Deterministic mask with fractional / zero / negative entries to exercise
    # the exact PyTorch `mask > 0` semantics (0.5 keeps the row, -1 and 0 drop it).
    mask = jnp.array(
        [1.0, 0.0, 0.5, -1.0, 2.0, 0.0, 0.25, 3.0,
         1.0, 1.0, 0.0, 0.7, -0.5, 1.5, 0.0, 1.0], jnp.float32)
    # PyTorch nn.LayerNorm default init is ones/zeros; randomize slightly to
    # exercise the affine path.
    gamma = 1.0 + 0.1 * jax.random.normal(k_g, (feature_n,), jnp.float32)
    beta = 0.1 * jax.random.normal(k_b, (feature_n,), jnp.float32)

    y = masked_layer_norm_1d(x, mask, gamma, beta)
    y = jax.block_until_ready(y)

    # Pure-JAX reference of the torch semantics. Since LayerNorm is row-wise,
    # gather/normalize/scatter == normalize-all-rows + zero the masked rows.
    eps = 1e-5
    mean = x.mean(-1, keepdims=True)
    var = ((x - mean) ** 2).mean(-1, keepdims=True)
    ynorm = (x - mean) * lax.rsqrt(var + eps) * gamma[None, :] + beta[None, :]
    ref = jnp.where((mask > 0)[:, None], ynorm, 0.0)

    assert y.shape == x.shape
    assert jnp.allclose(y, ref, atol=1e-5, rtol=1e-5)
    # Masked-out rows must be exactly zero, as in the PyTorch module.
    assert bool(jnp.all(jnp.where((mask > 0)[:, None], True, y == 0.0)))

    print("KERNEL_OK")
</pallas_src>

<mosaic_0001>
module attributes {stable_mosaic.version = 11 : i64} {
  func.func @_masked_layernorm_kernel(%arg0: i32, %arg1: memref<8x128xf32, #tpu.memory_space<vmem>>, %arg2: memref<16x1xf32, #tpu.memory_space<vmem>>, %arg3: memref<1x128xf32, #tpu.memory_space<vmem>>, %arg4: memref<1x128xf32, #tpu.memory_space<vmem>>, %arg5: memref<8x128xf32, #tpu.memory_space<vmem>>) attributes {dimension_semantics = [#tpu.dimension_semantics<parallel>], iteration_bounds = array<i64: 2>, scalar_prefetch = 0 : i64, scratch_operands = 0 : i64, tpu.core_type = #tpu.core_type<tc>, window_params = [{transform_indices = @transform_0, window_bounds = array<i64: 8, 128>}, {pipeline_mode = #tpu.pipeline_mode<synchronous>, transform_indices = @transform_1, window_bounds = array<i64: 16, 1>}, {pipeline_mode = #tpu.pipeline_mode<synchronous>, transform_indices = @transform_2, window_bounds = array<i64: 1, 128>}, {pipeline_mode = #tpu.pipeline_mode<synchronous>, transform_indices = @transform_3, window_bounds = array<i64: 1, 128>}, {transform_indices = @transform_4, window_bounds = array<i64: 8, 128>}]} {
    %c0 = arith.constant 0 : index
    %c0_0 = arith.constant 0 : index
    %0 = vector.load %arg1[%c0, %c0_0] : memref<8x128xf32, #tpu.memory_space<vmem>>, vector<8x128xf32>
    %cst = arith.constant dense<0.000000e+00> : vector<8xf32>
    %1 = vector.multi_reduction <add>, %0, %cst [1] : vector<8x128xf32> to vector<8xf32>
    %2 = vector.shape_cast %1 : vector<8xf32> to vector<8x1xf32>
    %cst_1 = arith.constant 1.280000e+02 : f32
    %3 = vector.broadcast %cst_1 : f32 to vector<8x1xf32>
    %4 = arith.divf %2, %3 : vector<8x1xf32>
    %5 = vector.broadcast %4 : vector<8x1xf32> to vector<8x128xf32>
    %6 = arith.subf %0, %5 : vector<8x128xf32>
    %7 = arith.mulf %6, %6 : vector<8x128xf32>
    %cst_2 = arith.constant dense<0.000000e+00> : vector<8xf32>
    %8 = vector.multi_reduction <add>, %7, %cst_2 [1] : vector<8x128xf32> to vector<8xf32>
    %9 = vector.shape_cast %8 : vector<8xf32> to vector<8x1xf32>
    %cst_3 = arith.constant 1.280000e+02 : f32
    %10 = vector.broadcast %cst_3 : f32 to vector<8x1xf32>
    %11 = arith.divf %9, %10 : vector<8x1xf32>
    %cst_4 = arith.constant 9.99999974E-6 : f32
    %12 = vector.broadcast %cst_4 : f32 to vector<8x1xf32>
    %13 = arith.addf %11, %12 : vector<8x1xf32>
    %14 = math.rsqrt %13 : vector<8x1xf32>
    %15 = vector.broadcast %14 : vector<8x1xf32> to vector<8x128xf32>
    %16 = arith.mulf %6, %15 : vector<8x128xf32>
    %c0_5 = arith.constant 0 : index
    %c0_6 = arith.constant 0 : index
    %17 = vector.load %arg3[%c0_5, %c0_6] : memref<1x128xf32, #tpu.memory_space<vmem>>, vector<1x128xf32>
    %18 = vector.broadcast %17 : vector<1x128xf32> to vector<8x128xf32>
    %19 = arith.mulf %16, %18 : vector<8x128xf32>
    %c0_7 = arith.constant 0 : index
    %c0_8 = arith.constant 0 : index
    %20 = vector.load %arg4[%c0_7, %c0_8] : memref<1x128xf32, #tpu.memory_space<vmem>>, vector<1x128xf32>
    %21 = vector.broadcast %20 : vector<1x128xf32> to vector<8x128xf32>
    %22 = arith.addf %19, %21 : vector<8x128xf32>
    %c8_i32 = arith.constant 8 : i32
    %23 = arith.muli %arg0, %c8_i32 : i32
    %24 = tpu.assume_multiple %23, 8 : i32
    %25 = arith.index_cast %24 : i32 to index
    %c0_9 = arith.constant 0 : index
    %26 = vector.load %arg2[%25, %c0_9] : memref<16x1xf32, #tpu.memory_space<vmem>>, vector<8x1xf32>
    %cst_10 = arith.constant 0.000000e+00 : f32
    %27 = vector.broadcast %cst_10 : f32 to vector<8x1xf32>
    %28 = arith.cmpf one, %26, %27 : vector<8x1xf32>
    %cst_11 = arith.constant 0.000000e+00 : f32
    %29 = vector.shape_cast %28 : vector<8x1xi1> to vector<8x1xi1>
    %30 = vector.broadcast %29 : vector<8x1xi1> to vector<8x128xi1>
    %31 = vector.broadcast %cst_11 : f32 to vector<8x128xf32>
    %32 = arith.select %30, %22, %31 : vector<8x128xi1>, vector<8x128xf32>
    %c0_12 = arith.constant 0 : index
    %c0_13 = arith.constant 0 : index
    %33 = vector.load %arg5[%c0_12, %c0_13] : memref<8x128xf32, #tpu.memory_space<vmem>>, vector<8x128xf32>
    tpu.vector_store %arg5[%c0_12, %c0_13], %32 {strides = array<i32>} : memref<8x128xf32, #tpu.memory_space<vmem>>, vector<8x128xf32>,
    return
  }
  func.func @transform_0(%arg0: i32) -> (i32, i32) {
    %c0_i32 = arith.constant 0 : i32
    %c0_i32_0 = arith.constant 0 : i32
    return %arg0, %c0_i32 : i32, i32
  }
  func.func @transform_1(%arg0: i32) -> (i32, i32) {
    %c0_i32 = arith.constant 0 : i32
    %c0_i32_0 = arith.constant 0 : i32
    %c0_i32_1 = arith.constant 0 : i32
    return %c0_i32, %c0_i32_0 : i32, i32
  }
  func.func @transform_2(%arg0: i32) -> (i32, i32) {
    %c0_i32 = arith.constant 0 : i32
    %c0_i32_0 = arith.constant 0 : i32
    %c0_i32_1 = arith.constant 0 : i32
    return %c0_i32, %c0_i32_0 : i32, i32
  }
  func.func @transform_3(%arg0: i32) -> (i32, i32) {
    %c0_i32 = arith.constant 0 : i32
    %c0_i32_0 = arith.constant 0 : i32
    %c0_i32_1 = arith.constant 0 : i32
    return %c0_i32, %c0_i32_0 : i32, i32
  }
  func.func @transform_4(%arg0: i32) -> (i32, i32) {
    %c0_i32 = arith.constant 0 : i32
    %c0_i32_0 = arith.constant 0 : i32
    return %arg0, %c0_i32 : i32, i32
  }
}

</mosaic_0001>

<llo_original>
// kernel: masked_layer_norm_1d.1
$region0: #{masked_layer_norm_1d.1}
  #allocation0 [shape = 'u32[]', space=smem, size = 0x4, offset = 0x4, fixed_abs, tag = 'smem constant byte address 0x4 - core index']
  #allocation1 [shape = 'u32[144,128]{1,0:T(1,128)}', space=vmem, size = 0x12000, scoped, tag = 'internal scratch']
  %s0 = inlined_call_operand.vmem [shape: f32[16,128], index: 0, kind: input, shape index: {}]
  %s1 = inlined_call_operand.vmem [shape: f32[16,1], index: 1, kind: input, shape index: {}]
  %s2 = inlined_call_operand.vmem [shape: f32[1,128], index: 2, kind: input, shape index: {}]
  %s3 = inlined_call_operand.vmem [shape: f32[1,128], index: 3, kind: input, shape index: {}]
  %s4 = inlined_call_operand.hbm [shape: f32[16,128], index: 4, kind: output, shape index: {}]
  %s5 = sld [smem:[#allocation0]]
  $region49: #{masked_layer_norm_1d.1} parent=0
    _
  %s7 = ssub.s32 1, %s5
  %s8 = scalar_select 0, %s7, %s5
  $region1: #{masked_layer_norm_1d.1} parent=0
    #allocation2 [shape = 'u8[8192]{0}', space=vmem, size = 0x2000, scoped, tag = 'output window, operand 0']
    #allocation3 [shape = 's32[2]{0}', space=sflag, size = 0x8, scoped, tag = 'scoped memory for masked_layer_norm_1d.1']
    %9 = vsyncpa [#allocation3], 0
    %s10 = scalar_lea.sflag [#allocation3], 1
    %11 = vsyncpa %s10, 0
    loop: start=0, step=1, limit=4
    $region2: #{masked_layer_norm_1d.1} parent=1 // loop_pre_header
      _
    $region3: #{masked_layer_norm_1d.1} parent=1 // loop_header
      %s13 = sphi 0, %s17
      %p14 = scmp.ge.s32.totalorder %s13, 4
      %s23 = sphi 0, %s25
      %s26 = sphi 0, %s23
      %s27 = sphi 0, %s26
      %s43 = sphi 0, %s27
      %s47 = sphi 0, %s47
      %s49 = sphi 0, %s47
      %s50 = sphi 0, %s49
      %s64 = sphi 0, %s50
      %s68 = sphi 0, %s68
      %s70 = sphi 0, %s68
      %s71 = sphi 0, %s70
      %s85 = sphi 0, %s71
      %s89 = sphi 0, %s89
      %s91 = sphi 0, %s89
      %s92 = sphi 0, %s91
      %s106 = sphi 0, %s92
      %s112 = sphi 0, %s114
      %s115 = sphi 0, %s112
      %s116 = sphi 0, %s115
      %s132 = sphi 0, %s116
    $region4: #{masked_layer_norm_1d.1} parent=1 // loop_header_branch
      %16 = sbr.rel (%p14) target = $region8
    $region5: #{masked_layer_norm_1d.1} parent=1 // loop_body
      %s18 = ssub.s32 %s13, 1
      %s19 = ssub.s32 %s13, 2
      %s20 = sadd.s32 %s13, 1
      %s21 = ssub.s32 %s13, %s20
      %p22 = scmp.eq.s32.totalorder %s21, 0
      %s24 = sadd.s32 %s23, 1
      %s25 = scalar_select %p22, %s23, %s24
      %p28 = pneg %p22
      %p29 = scmp.eq.s32.totalorder %s13, 1
      %p30 = por %p28, %p29
      %p31 = scmp.ne.s32.totalorder %s23, %s26
      %p32 = scmp.eq.s32.totalorder %s13, 0
      %p33 = por %p31, %p32
      %p34 = scmp.ne.s32.totalorder %s23, %s26
      %p35 = scmp.eq.s32.totalorder %s18, 1
      %p36 = por %p34, %p35
      %p37 = scmp.ne.s32.totalorder %s26, %s27
      %p38 = scmp.eq.s32.totalorder %s18, 0
      %p39 = por %p37, %p38
      %p40 = scmp.ne.s32.totalorder %s26, %s27
      %p41 = scmp.eq.s32.totalorder %s19, 1
      %p42 = por %p40, %p41
      %p44 = scmp.ne.s32.totalorder %s27, %s43
      %p45 = scmp.eq.s32.totalorder %s19, 0
      %p46 = por %p44, %p45
      %s48 = sadd.s32 %s47, 1
      %p51 = scmp.eq.s32.totalorder %s13, 1
      %p52 = scmp.ne.s32.totalorder %s47, %s49
      %p53 = scmp.eq.s32.totalorder %s13, 0
      %p54 = por %p52, %p53
      %p55 = scmp.ne.s32.totalorder %s47, %s49
      %p56 = scmp.eq.s32.totalorder %s18, 1
      %p57 = por %p55, %p56
      %p58 = scmp.ne.s32.totalorder %s49, %s50
      %p59 = scmp.eq.s32.totalorder %s18, 0
      %p60 = por %p58, %p59
      %p61 = scmp.ne.s32.totalorder %s49, %s50
      %p62 = scmp.eq.s32.totalorder %s19, 1
      %p63 = por %p61, %p62
      %p65 = scmp.ne.s32.totalorder %s50, %s64
      %p66 = scmp.eq.s32.totalorder %s19, 0
      %p67 = por %p65, %p66
      %s69 = sadd.s32 %s68, 1
      %p72 = scmp.eq.s32.totalorder %s13, 1
      %p73 = scmp.ne.s32.totalorder %s68, %s70
      %p74 = scmp.eq.s32.totalorder %s13, 0
      %p75 = por %p73, %p74
      %p76 = scmp.ne.s32.totalorder %s68, %s70
      %p77 = scmp.eq.s32.totalorder %s18, 1
      %p78 = por %p76, %p77
      %p79 = scmp.ne.s32.totalorder %s70, %s71
      %p80 = scmp.eq.s32.totalorder %s18, 0
      %p81 = por %p79, %p80
      %p82 = scmp.ne.s32.totalorder %s70, %s71
      %p83 = scmp.eq.s32.totalorder %s19, 1
      %p84 = por %p82, %p83
      %p86 = scmp.ne.s32.totalorder %s71, %s85
      %p87 = scmp.eq.s32.totalorder %s19, 0
      %p88 = por %p86, %p87
      %s90 = sadd.s32 %s89, 1
      %p93 = scmp.eq.s32.totalorder %s13, 1
      %p94 = scmp.ne.s32.totalorder %s89, %s91
      %p95 = scmp.eq.s32.totalorder %s13, 0
      %p96 = por %p94, %p95
      %p97 = scmp.ne.s32.totalorder %s89, %s91
      %p98 = scmp.eq.s32.totalorder %s18, 1
      %p99 = por %p97, %p98
      %p100 = scmp.ne.s32.totalorder %s91, %s92
      %p101 = scmp.eq.s32.totalorder %s18, 0
      %p102 = por %p100, %p101
      %p103 = scmp.ne.s32.totalorder %s91, %s92
      %p104 = scmp.eq.s32.totalorder %s19, 1
      %p105 = por %p103, %p104
      %p107 = scmp.ne.s32.totalorder %s92, %s106
      %p108 = scmp.eq.s32.totalorder %s19, 0
      %p109 = por %p107, %p108
      %s110 = ssub.s32 %s13, %s20
      %p111 = scmp.eq.s32.totalorder %s110, 0
      %s113 = sadd.s32 %s112, 1
      %s114 = scalar_select %p111, %s112, %s113
      %p117 = pneg %p111
      %p118 = scmp.eq.s32.totalorder %s13, 1
      %p119 = por %p117, %p118
      %p120 = scmp.ne.s32.totalorder %s112, %s115
      %p121 = scmp.eq.s32.totalorder %s13, 0
      %p122 = por %p120, %p121
      %p123 = scmp.ne.s32.totalorder %s112, %s115
      %p124 = scmp.eq.s32.totalorder %s18, 1
      %p125 = por %p123, %p124
      %p126 = scmp.ne.s32.totalorder %s115, %s116
      %p127 = scmp.eq.s32.totalorder %s18, 0
      %p128 = por %p126, %p127
      %p129 = scmp.ne.s32.totalorder %s115, %s116
      %p130 = scmp.eq.s32.totalorder %s19, 1
      %p131 = por %p129, %p130
      %p133 = scmp.ne.s32.totalorder %s116, %s132
      %p134 = scmp.eq.s32.totalorder %s19, 0
      %p135 = por %p133, %p134
      %p136 = scmp.le.s32.totalorder 1, %s13
      %p137 = scmp.lt.s32.totalorder %s13, 3
      %p138 = pnand %p136, %p137
      %p139 = pneg %p138
      // Predicated region
      $region9: #{masked_layer_norm_1d.1} parent=5 // pred_check
        _
      $region10: #{masked_layer_norm_1d.1} parent=5 // pred_check_branch
        %141 = sbr.rel (%p138) target = $region12
      $region11: #{masked_layer_norm_1d.1} parent=5 // pred_region
        %s142 = ssub.s32 %s13, 1
        // Predicated region
        $region13: #{masked_layer_norm_1d.1} parent=11 // pred_check
          %p143 = pneg %p60
        $region14: #{masked_layer_norm_1d.1} parent=11 // pred_check_branch
          %145 = sbr.rel (%p143) target = $region16
        $region15: #{masked_layer_norm_1d.1} parent=11 // pred_region
          _
        $region16: #{masked_layer_norm_1d.1} parent=11 // pred_fallthru
          _
        // Predicated region
        $region17: #{masked_layer_norm_1d.1} parent=11 // pred_check
          %p146 = pneg %p81
        $region18: #{masked_layer_norm_1d.1} parent=11 // pred_check_branch
          %148 = sbr.rel (%p146) target = $region20
        $region19: #{masked_layer_norm_1d.1} parent=11 // pred_region
          _
        $region20: #{masked_layer_norm_1d.1} parent=11 // pred_fallthru
          _
        // Predicated region
        $region21: #{masked_layer_norm_1d.1} parent=11 // pred_check
          %p149 = pneg %p102
        $region22: #{masked_layer_norm_1d.1} parent=11 // pred_check_branch
          %151 = sbr.rel (%p149) target = $region24
        $region23: #{masked_layer_norm_1d.1} parent=11 // pred_region
          _
        $region24: #{masked_layer_norm_1d.1} parent=11 // pred_fallthru
          _
      $region12: #{masked_layer_norm_1d.1} parent=5 // pred_fallthru
        _
      %p152 = scmp.lt.s32.totalorder %s13, 2
      // Predicated region
      $region25: #{masked_layer_norm_1d.1} parent=5 // pred_check
        %p153 = pneg %p152
      $region26: #{masked_layer_norm_1d.1} parent=5 // pred_check_branch
        %155 = sbr.rel (%p153) target = $region28
      $region27: #{masked_layer_norm_1d.1} parent=5 // pred_region
        // Predicated region
        $region29: #{masked_layer_norm_1d.1} parent=27 // pred_check
          %p156 = pneg %p33
        $region30: #{masked_layer_norm_1d.1} parent=27 // pred_check_branch
          %158 = sbr.rel (%p156) target = $region32
        $region31: #{masked_layer_norm_1d.1} parent=27 // pred_region
          %p159 = scmp.lt.s32.totalorder %s13, 1
          %s160 = scalar_select %p159, %s13, 1
          %s161 = smul.addr %s160, 8
          %s162 = scalar_lea.vmem %s0, %s161
        $region32: #{masked_layer_norm_1d.1} parent=27 // pred_fallthru
          _
      $region28: #{masked_layer_norm_1d.1} parent=5 // pred_fallthru
        _
      %p163 = scmp.le.s32.totalorder 1, %s13
      %p164 = scmp.lt.s32.totalorder %s13, 3
      %p165 = pnand %p163, %p164
      %p166 = pneg %p165
      // Predicated region
      $region33: #{masked_layer_norm_1d.1} parent=5 // pred_check
        _
      $region34: #{masked_layer_norm_1d.1} parent=5 // pred_check_branch
        %168 = sbr.rel (%p165) target = $region36
      $region35: #{masked_layer_norm_1d.1} parent=5 // pred_region
        %s169 = ssub.s32 %s13, 1
        %p170 = scmp.lt.s32.totalorder %s18, 1
        %s171 = scalar_select %p170, %s18, 1
        %s172 = smul.addr %s171, 8
        %s173 = scalar_lea.vmem %s0, %s172
        %p174 = pneg %p39
        %p175 = pneg %p36
        %p176 = pneg %p60
        %p177 = pneg %p57
        %p178 = pneg %p81
        %p179 = pneg %p78
        %p180 = pneg %p102
        %p181 = pneg %p99
        %p182 = pneg %p128
        %p183 = pneg %p125
        %s184 = sand.u32 %s115, 1
        %s185 = scalar_lea.sflag [#allocation3], %s184
        %s186 = sand.u32 %s115, 1
        %s187 = smul.addr %s186, 8
        %s188 = scalar_lea.vmem [#allocation2], %s187
        %p189 = scmp.lt.s32.totalorder %s18, 1
        %s190 = scalar_select %p189, %s18, 1
        %s191 = smul.addr %s190, 8
        %s192 = scalar_lea.vmem %s0, %s191
        %v193 = vld [vmem:[%s192] sm:$0xff]
        %194 = vadd.xlane.f32.xlu0 %v193
        %v195 = vpop.xlane.xlu0 %194
        %v196 = vrcp.pop 128.0
        %v197 = vmul.f32 %v195, %v196
        %v198 = vsub.f32 %v193, %v197
        %v199 = vmul.f32 %v198, %v198
        %200 = vadd.xlane.f32.xlu0 %v199
        %v201 = vpop.xlane.xlu0 %200
        %v202 = vmul.f32 %v201, %v196
        %v203 = vadd.f32 %v202, 1e-05
        %v204 = vrsqrt.pop %v203
        %v205 = vmul.f32 %v198, %v204
        %v206 = vld [vmem:[%s2] sm:$0x1]
        %v208 = vlaneseq
        %v209 = vshrl.u32 %v208, 7
        %v210 = vsub.s32 0, %v209
        %v211 = vrot.slane %v206, %v210
        %v213 = vmul.f32 %v205, %v211
        %v214 = vld [vmem:[%s3] sm:$0x1]
        %v216 = vlaneseq
        %v217 = vshrl.u32 %v216, 7
        %v218 = vsub.s32 0, %v217
        %v219 = vrot.slane %v214, %v218
        %v221 = vadd.f32 %v213, %v219
        %s222 = smul.u32 %s18, 8
        %s223 = scalar_lea.vmem %s1, %s222
        %v224 = vld [vmem:[%s223] sm:$0xff]
        %vm225 = vcmp.ne.f32.partialorder %v224, 0.0
        %v226 = vsel %vm225, 1, 0
        %227 = vset.pattern.permute.xlu0 0
        %228 = vperm.xlu0 %227, %v226
        %v229 = vpop.permute.xlu0 %228
        %vm230 = vcmp.eq.s32.totalorder %v229, 1
        %v231 = vsel %vm230, %v221, 0.0
        %232 = vst [vmem:[%s188] sm:$0xff] %v231
        %s233 = sand.u32 %s115, 1
        %s234 = scalar_lea.sflag [#allocation3], %s233
        %s235 = sand.u32 %s115, 1
        %s236 = smul.addr %s235, 8
        %s237 = scalar_lea.vmem [#allocation2], %s236
        // Predicated region
        $region37: #{masked_layer_norm_1d.1} parent=35 // pred_check
          %p238 = pneg %p125
        $region38: #{masked_layer_norm_1d.1} parent=35 // pred_check_branch
          %240 = sbr.rel (%p238) target = $region40
        $region39: #{masked_layer_norm_1d.1} parent=35 // pred_region
          %s242 = ssub.s32 128, 128
          %243 = vsyncadd %s234, %s242
          %s244 = smul.addr %s18, 128
          %s245 = scalar_lea.hbm %s4, %s244
          %s247 = sshll.u32 %s237, 4
          %s248 = int_to_ptr.vmem [resolvable:$true] %s247
          %250 = dma.vmem_to_hbm [thread:$0]  %s248, 128, %s245, %s234
        $region40: #{masked_layer_norm_1d.1} parent=35 // pred_fallthru
          _
      $region36: #{masked_layer_norm_1d.1} parent=5 // pred_fallthru
        _
      %p251 = scmp.le.s32.totalorder 2, %s13
      // Predicated region
      $region41: #{masked_layer_norm_1d.1} parent=5 // pred_check
        %p252 = pneg %p251
      $region42: #{masked_layer_norm_1d.1} parent=5 // pred_check_branch
        %254 = sbr.rel (%p252) target = $region44
      $region43: #{masked_layer_norm_1d.1} parent=5 // pred_region
        %s255 = ssub.s32 %s13, 2
        // Predicated region
        $region45: #{masked_layer_norm_1d.1} parent=43 // pred_check
          %p256 = pneg %p131
        $region46: #{masked_layer_norm_1d.1} parent=43 // pred_check_branch
          %258 = sbr.rel (%p256) target = $region48
        $region47: #{masked_layer_norm_1d.1} parent=43 // pred_region
          %s259 = sand.u32 %s116, 1
          %s260 = scalar_lea.sflag [#allocation3], %s259
          %s261 = sand.u32 %s116, 1
          %s262 = smul.addr %s261, 8
          %s263 = scalar_lea.vmem [#allocation2], %s262
          %264 = dma.done %s260, 128
        $region48: #{masked_layer_norm_1d.1} parent=43 // pred_fallthru
          _
      $region44: #{masked_layer_norm_1d.1} parent=5 // pred_fallthru
        _
    $region6: #{masked_layer_norm_1d.1} parent=1 // loop_footer
      %s17 = sadd.s32 1, %s13
    $region7: #{masked_layer_norm_1d.1} parent=1 // loop_footer_branch
      %12 = sbr.rel target = $region3
    $region8: #{masked_layer_norm_1d.1} parent=1 // loop_exit
      _
    %265 = vsyncpa [#allocation3], 1
    %s266 = scalar_lea.sflag [#allocation3], 1
    %267 = vsyncpa %s266, 1

</llo_original>
